<compile_context>
chip_gen: v7x
topology: tpu7x:2x2x1
jax: 0.10.0
libtpu: 0.0.40
codegen_flags: <defaults>
</compile_context>

<pallas_src>
import functools

import numpy as np

import jax
import jax.numpy as jnp
from jax import lax
from jax.experimental import pallas as pl
from jax.experimental.pallas import tpu as pltpu


def _round_up(x, m):
    return ((x + m - 1) // m) * m


# ----------------------------------------------------------------------------
# Pallas kernel: one (batch, pixel-tile) step of the fused detection heads.
# ----------------------------------------------------------------------------
def _fused_heads_kernel(tile_level_ref, x_ref, w_ref, b_ref, out_ref, *,
                        cls_lo, cls_hi, apply_softmax):
    """Fused 1x1-conv heads + optional softmax epilogue.

    tile_level_ref: (T,) int32 in SMEM  -- FPN level of every pixel tile.
    x_ref:   (1, C_in, TILE_P) bf16     -- un-transposed NCHW feature tile.
    w_ref:   (L, C_in, C_PAD)  bf16     -- VMEM-resident packed weight stack.
    b_ref:   (L, 1,    C_PAD)  f32      -- VMEM-resident packed bias stack.
    out_ref: (1, TILE_P, C_PAD) f32     -- packed [bbox | cls | ldm | pad].
    """
    lvl = tile_level_ref[pl.program_id(1)]          # level of this pixel tile
    x = x_ref[0]                                    # (C_in, TILE_P)
    w = w_ref[lvl]                                  # (C_in, C_PAD)

    # Contract the C axis of both operands (transposed-LHS matmul on the MXU)
    # so the NCHW feature never needs an explicit transpose.
    acc = lax.dot_general(
        x, w, dimension_numbers=(((0,), (0,)), ((), ())),
        preferred_element_type=jnp.float32)          # (TILE_P, C_PAD) f32
    acc = acc + b_ref[lvl]                           # (1, C_PAD) broadcast

    if apply_softmax:
        # Class weights are packed in pairwise-difference form, so a plain
        # sigmoid on the class columns IS the exact 2-way softmax.
        col = lax.broadcasted_iota(jnp.int32, acc.shape, 1)
        is_cls = (col >= cls_lo) & (col < cls_hi)
        probs = pl.reciprocal(1.0 + jnp.exp(-acc), approx=True)   # EUP slot
        acc = jnp.where(is_cls, probs, acc)

    out_ref[0, :, :] = acc.astype(out_ref.dtype)


# ----------------------------------------------------------------------------
# Wrapper
# ----------------------------------------------------------------------------
class RetinaFaceHeadsPallas:
    """Detection heads of RetinaFaceLandmarkPCADetectionNet3Layer."""

    def __init__(self, out_channel=64, num_anchors=2, f_size=5, fpn_num=3,
                 phase="train", tile_p=512, key=None):
        if key is None:
            key = jax.random.PRNGKey(0)
        self.out_channel = out_channel
        self.num_anchors = num_anchors
        self.f_size = f_size
        self.fpn_num = fpn_num
        self.phase = phase
        self.tile_p = tile_p

        self.bbox_dim = num_anchors * 4
        self.cls_dim = num_anchors * 2
        self.ldm_dim = num_anchors * f_size
        self.c_out = self.bbox_dim + self.cls_dim + self.ldm_dim   # 22
        self.c_pad = max(32, _round_up(self.c_out, 8))             # 32

        # Deterministic parameter init (stand-in for the PyTorch conv init).
        # NOTE: real PyTorch conv weights (O, I, 1, 1) must be reshaped /
        # transposed to (I, O), keeping anchor-major output-channel order.
        keys = jax.random.split(key, fpn_num * 6)
        scale = 0.05
        w_raw, b_raw, w_tr, b_tr, w_ev, b_ev = [], [], [], [], [], []
        for lvl in range(fpn_num):
            kw_b, kb_b, kw_c, kb_c, kw_l, kb_l = keys[lvl * 6:(lvl + 1) * 6]
            w_bbox = jax.random.normal(kw_b, (out_channel, self.bbox_dim), jnp.float32) * scale
            b_bbox = jax.random.normal(kb_b, (self.bbox_dim,), jnp.float32) * scale
            w_cls = jax.random.normal(kw_c, (out_channel, self.cls_dim), jnp.float32) * scale
            b_cls = jax.random.normal(kb_c, (self.cls_dim,), jnp.float32) * scale
            w_ldm = jax.random.normal(kw_l, (out_channel, self.ldm_dim), jnp.float32) * scale
            b_ldm = jax.random.normal(kb_l, (self.ldm_dim,), jnp.float32) * scale

            w_raw.append(jnp.concatenate([w_bbox, w_cls, w_ldm], axis=1))
            b_raw.append(jnp.concatenate([b_bbox, b_cls, b_ldm], axis=0))
            w_tr.append(self._pack_w(w_bbox, w_cls, w_ldm))
            b_tr.append(self._pack_b(b_bbox, b_cls, b_ldm))
            # Eval packing: class columns hold pairwise logit differences, so
            # the in-kernel sigmoid epilogue computes the exact softmax.
            w_ev.append(self._pack_w(w_bbox, self._diff_cols(w_cls), w_ldm))
            b_ev.append(self._pack_b(b_bbox, self._diff_cols(b_cls), b_ldm))

        # f32 master copies (used by the pure-JAX reference).
        self.w_raw = jnp.stack(w_raw)                       # (L, C_in, c_out)
        self.b_raw = jnp.stack(b_raw)                       # (L, c_out)
        # Kernel copies: weights bf16 (MXU inputs), biases f32 (f32 epilogue).
        self.w_train = jnp.stack(w_tr).astype(jnp.bfloat16)  # (L, C_in, c_pad)
        self.b_train = jnp.stack(b_tr)                        # (L, 1, c_pad)
        self.w_eval = jnp.stack(w_ev).astype(jnp.bfloat16)
        self.b_eval = jnp.stack(b_ev)

    # -- packing helpers ---------------------------------------------------
    def _pack_w(self, w_bbox, w_cls, w_ldm):
        w = jnp.concatenate([w_bbox, w_cls, w_ldm], axis=1)      # (C_in, 22)
        return jnp.pad(w, ((0, 0), (0, self.c_pad - self.c_out)))

    def _pack_b(self, b_bbox, b_cls, b_ldm):
        b = jnp.concatenate([b_bbox, b_cls, b_ldm], axis=0)      # (22,)
        return jnp.pad(b, (0, self.c_pad - self.c_out))[None, :]

    @staticmethod
    def _diff_cols(w_cls):
        """[a0c0, a0c1, a1c0, a1c1, ...] -> pairwise differences (same shape)."""
        c0 = w_cls[..., 0::2]
        c1 = w_cls[..., 1::2]
        d = c0 - c1
        return jnp.stack([d, -d], axis=-1).reshape(w_cls.shape)

    # -- forward -------------------------------------------------------------
    def __call__(self, features_nchw):
        """features_nchw: list of fpn_num SSH feature maps (PyTorch NCHW)."""
        assert len(features_nchw) == self.fpn_num
        A = self.num_anchors

        xs, pixel_counts = [], []
        for feat in features_nchw:
            n, c, h, w = feat.shape
            # NCHW -> (N, C, H*W): no transpose; bf16 halves input DMA bytes
            # and gives single-pass MXU throughput.
            xs.append(feat.reshape(n, c, h * w).astype(jnp.bfloat16))
            pixel_counts.append(h * w)
        n_batch, c_in = xs[0].shape[0], xs[0].shape[1]

        # Pixel-tile size: multiple of 128 lanes, capped by the largest level.
        tile_p = min(_round_up(self.tile_p, 128),
                     _round_up(max(pixel_counts), 128))

        # Pad each level's P to a multiple of tile_p and concatenate, so every
        # pixel tile belongs to exactly one FPN level.
        padded, tiles_per_level, pad_offsets = [], [], []
        off = 0
        for x, p in zip(xs, pixel_counts):
            p_pad = _round_up(p, tile_p)
            if p_pad != p:
                x = jnp.pad(x, ((0, 0), (0, 0), (0, p_pad - p)))
            padded.append(x)
            tiles_per_level.append(p_pad // tile_p)
            pad_offsets.append(off)
            off += p_pad
        p_pad_total = off
        x_all = jnp.concatenate(padded, axis=2)        # (N, C_in, P_pad_total)

        t_total = sum(tiles_per_level)
        tile_level = jnp.asarray(
            np.repeat(np.arange(self.fpn_num), tiles_per_level).astype(np.int32))

        apply_softmax = self.phase != "train"
        w_stack = self.w_eval if apply_softmax else self.w_train
        b_stack = self.b_eval if apply_softmax else self.b_train

        kernel = functools.partial(
            _fused_heads_kernel,
            cls_lo=self.bbox_dim,
            cls_hi=self.bbox_dim + self.cls_dim,
            apply_softmax=apply_softmax)

        out = pl.pallas_call(
            kernel,
            out_shape=jax.ShapeDtypeStruct((n_batch, p_pad_total, self.c_pad),
                                           jnp.float32),
            grid_spec=pltpu.PrefetchScalarGridSpec(
                num_scalar_prefetch=1,                 # tile -> level table
                grid=(n_batch, t_total),
                in_specs=[
                    # One pixel tile per step (double-buffered pipeline).
                    pl.BlockSpec((1, c_in, tile_p),
                                 lambda n, t, lvl: (n, 0, t)),
                    # Whole weight / bias stacks: constant block index, so
                    # they are DMA'd once and stay resident in VMEM.
                    pl.BlockSpec((self.fpn_num, c_in, self.c_pad),
                                 lambda n, t, lvl: (0, 0, 0)),
                    pl.BlockSpec((self.fpn_num, 1, self.c_pad),
                                 lambda n, t, lvl: (0, 0, 0)),
                ],
                out_specs=pl.BlockSpec((1, tile_p, self.c_pad),
                                       lambda n, t, lvl: (n, t, 0)),
            ),
            compiler_params=pltpu.CompilerParams(
                dimension_semantics=("parallel", "parallel")),
        )(tile_level, x_all, w_stack, b_stack)

        # Unpack: same memory ordering as PyTorch permute(0,2,3,1).view + cat.
        bb, cc, ll = [], [], []
        for lvl, p in enumerate(pixel_counts):
            o = out[:, pad_offsets[lvl]:pad_offsets[lvl] + p, :]
            bb.append(o[..., :self.bbox_dim].reshape(n_batch, p * A, 4))
            cc.append(o[..., self.bbox_dim:self.bbox_dim + self.cls_dim]
                      .reshape(n_batch, p * A, 2))
            ll.append(o[..., self.bbox_dim + self.cls_dim:self.c_out]
                      .reshape(n_batch, p * A, self.f_size))
        return (jnp.concatenate(bb, axis=1),
                jnp.concatenate(cc, axis=1),
                jnp.concatenate(ll, axis=1))


# ----------------------------------------------------------------------------
# Pure-JAX f32 reference for a correctness spot-check
# ----------------------------------------------------------------------------
def _reference(model, features_nchw):
    A = model.num_anchors
    bb, cc, ll = [], [], []
    for lvl, feat in enumerate(features_nchw):
        n, c, h, w = feat.shape
        out = jnp.einsum("nchw,co->nhwo", feat, model.w_raw[lvl]) + model.b_raw[lvl]
        bb.append(out[..., :model.bbox_dim].reshape(n, h * w * A, 4))
        cc.append(out[..., model.bbox_dim:model.bbox_dim + model.cls_dim]
                  .reshape(n, h * w * A, 2))
        ll.append(out[..., model.bbox_dim + model.cls_dim:]
                  .reshape(n, h * w * A, model.f_size))
    return (jnp.concatenate(bb, 1), jnp.concatenate(cc, 1),
            jnp.concatenate(ll, 1))


if __name__ == "__main__":
    key = jax.random.PRNGKey(0)
    k1, k2, k3, kp = jax.random.split(key, 4)

    # Three SSH feature maps (NCHW, as PyTorch would produce): batch=2,
    # out_channel=64, spatial pyramid 16/8/4.
    feat1 = jax.random.normal(k1, (2, 64, 16, 16), jnp.float32)
    feat2 = jax.random.normal(k2, (2, 64, 8, 8), jnp.float32)
    feat3 = jax.random.normal(k3, (2, 64, 4, 4), jnp.float32)
    features = [feat1, feat2, feat3]

    # tile_p=128 at these toy sizes so the multi-tile / multi-level grid path
    # is exercised (production default: 512).
    model = RetinaFaceHeadsPallas(out_channel=64, num_anchors=2, f_size=5,
                                  phase="train", tile_p=128, key=kp)

    bbox, cls, ldm = model(features)
    jax.block_until_ready((bbox, cls, ldm))

    # Shape checks ((256 + 64 + 16) pixels * 2 anchors = 672 priors).
    assert bbox.shape == (2, 672, 4), bbox.shape
    assert cls.shape == (2, 672, 2), cls.shape
    assert ldm.shape == (2, 672, 5), ldm.shape

    # Numerical spot-check vs. the pure-JAX f32 reference (bf16 MXU inputs =>
    # slightly looser tolerances than pure f32).
    rb, rc, rl = _reference(model, features)
    assert jnp.allclose(bbox, rb, atol=2e-2, rtol=2e-2)
    assert jnp.allclose(cls, rc, atol=2e-2, rtol=2e-2)
    assert jnp.allclose(ldm, rl, atol=2e-2, rtol=2e-2)

    # Eval phase: fused softmax epilogue inside the same kernel.
    model.phase = "eval"
    bbox_e, cls_sm, ldm_e = model(features)
    jax.block_until_ready((bbox_e, cls_sm, ldm_e))
    assert jnp.allclose(jnp.sum(cls_sm, axis=-1), 1.0, atol=5e-3)
    assert jnp.allclose(cls_sm, jax.nn.softmax(rc, axis=-1),
                        atol=1e-2, rtol=1e-2)
    assert jnp.allclose(bbox_e, rb, atol=2e-2, rtol=2e-2)
    assert jnp.allclose(ldm_e, rl, atol=2e-2, rtol=2e-2)

    print("KERNEL_OK")
</pallas_src>

<mosaic_0001>
module attributes {stable_mosaic.version = 11 : i64} {
  func.func @_fused_heads_kernel(%arg0: i32, %arg1: i32, %arg2: memref<4xi32, #tpu.memory_space<smem>>, %arg3: memref<1x64x128xbf16, #tpu.memory_space<vmem>>, %arg4: memref<3x64x32xbf16, #tpu.memory_space<vmem>>, %arg5: memref<3x1x32xf32, #tpu.memory_space<vmem>>, %arg6: memref<1x128x32xf32, #tpu.memory_space<vmem>>) attributes {dimension_semantics = [#tpu.dimension_semantics<parallel>, #tpu.dimension_semantics<parallel>], iteration_bounds = array<i64: 2, 4>, scalar_prefetch = 1 : i64, scratch_operands = 0 : i64, tpu.core_type = #tpu.core_type<tc>, window_params = [{transform_indices = @transform_0, window_bounds = array<i64: 1, 64, 128>}, {pipeline_mode = #tpu.pipeline_mode<synchronous>, transform_indices = @transform_1, window_bounds = array<i64: 3, 64, 32>}, {pipeline_mode = #tpu.pipeline_mode<synchronous>, transform_indices = @transform_2, window_bounds = array<i64: 3, 1, 32>}, {transform_indices = @transform_3, window_bounds = array<i64: 1, 128, 32>}]} {
    %0 = arith.index_cast %arg1 : i32 to index
    %1 = memref.load %arg2[%0] : memref<4xi32, #tpu.memory_space<smem>>
    %c0 = arith.constant 0 : index
    %c0_0 = arith.constant 0 : index
    %c0_1 = arith.constant 0 : index
    %2 = vector.load %arg3[%c0, %c0_0, %c0_1] : memref<1x64x128xbf16, #tpu.memory_space<vmem>>, vector<1x64x128xbf16>
    %3 = vector.shape_cast %2 : vector<1x64x128xbf16> to vector<64x128xbf16>
    %4 = arith.index_cast %1 : i32 to index
    %c0_2 = arith.constant 0 : index
    %c0_3 = arith.constant 0 : index
    %5 = vector.load %arg4[%4, %c0_2, %c0_3] : memref<3x64x32xbf16, #tpu.memory_space<vmem>>, vector<1x64x32xbf16>
    %6 = vector.shape_cast %5 : vector<1x64x32xbf16> to vector<64x32xbf16>
    %cst = arith.constant dense<0.000000e+00> : vector<128x32xf32>
    %7 = tpu.matmul %3, %6, %cst {dimension_numbers = #tpu.dot_dimension_numbers<[0], [0], [1], [1], [0, 1, 1, 1], [], []>} : vector<64x128xbf16>, vector<64x32xbf16>, vector<128x32xf32> -> vector<128x32xf32>
    %8 = arith.index_cast %1 : i32 to index
    %c0_4 = arith.constant 0 : index
    %c0_5 = arith.constant 0 : index
    %9 = vector.load %arg5[%8, %c0_4, %c0_5] : memref<3x1x32xf32, #tpu.memory_space<vmem>>, vector<1x1x32xf32>
    %10 = vector.shape_cast %9 : vector<1x1x32xf32> to vector<1x32xf32>
    %11 = vector.broadcast %10 : vector<1x32xf32> to vector<128x32xf32>
    %12 = arith.addf %7, %11 : vector<128x32xf32>
    %c0_6 = arith.constant 0 : index
    %c0_7 = arith.constant 0 : index
    %c0_8 = arith.constant 0 : index
    %13 = vector.load %arg6[%c0_6, %c0_7, %c0_8] : memref<1x128x32xf32, #tpu.memory_space<vmem>>, vector<1x128x32xf32>
    %14 = vector.shape_cast %13 : vector<1x128x32xf32> to vector<128x32xf32>
    %15 = vector.shape_cast %12 : vector<128x32xf32> to vector<1x128x32xf32>
    tpu.vector_store %arg6[%c0_6, %c0_7, %c0_8], %15 {strides = array<i32>} : memref<1x128x32xf32, #tpu.memory_space<vmem>>, vector<1x128x32xf32>,
    return
  }
  func.func @transform_0(%arg0: i32, %arg1: i32, %arg2: memref<4xi32, #tpu.memory_space<smem>>) -> (i32, i32, i32) {
    %c0_i32 = arith.constant 0 : i32
    %c0_i32_0 = arith.constant 0 : i32
    return %arg0, %c0_i32, %arg1 : i32, i32, i32
  }
  func.func @transform_1(%arg0: i32, %arg1: i32, %arg2: memref<4xi32, #tpu.memory_space<smem>>) -> (i32, i32, i32) {
    %c0_i32 = arith.constant 0 : i32
    %c0_i32_0 = arith.constant 0 : i32
    %c0_i32_1 = arith.constant 0 : i32
    %c0_i32_2 = arith.constant 0 : i32
    return %c0_i32, %c0_i32_0, %c0_i32_1 : i32, i32, i32
  }
  func.func @transform_2(%arg0: i32, %arg1: i32, %arg2: memref<4xi32, #tpu.memory_space<smem>>) -> (i32, i32, i32) {
    %c0_i32 = arith.constant 0 : i32
    %c0_i32_0 = arith.constant 0 : i32
    %c0_i32_1 = arith.constant 0 : i32
    %c0_i32_2 = arith.constant 0 : i32
    return %c0_i32, %c0_i32_0, %c0_i32_1 : i32, i32, i32
  }
  func.func @transform_3(%arg0: i32, %arg1: i32, %arg2: memref<4xi32, #tpu.memory_space<smem>>) -> (i32, i32, i32) {
    %c0_i32 = arith.constant 0 : i32
    %c0_i32_0 = arith.constant 0 : i32
    return %arg0, %arg1, %c0_i32 : i32, i32, i32
  }
}

</mosaic_0001>

<llo_original>
// kernel: tpu_custom_call.1
$region0: #{tpu_custom_call.1}
  #allocation0 [shape = 'u32[]', space=smem, size = 0x4, offset = 0x4, fixed_abs, tag = 'smem constant byte address 0x4 - core index']
  #allocation1 [shape = 'u32[144,128]{1,0:T(1,128)}', space=vmem, size = 0x12000, scoped, tag = 'internal scratch']
  #allocation2 [shape = 's32[1]{0}', space=sflag, size = 0x4, scoped, tag = 'scoped memory for tpu_custom_call.1']
  #allocation3 [shape = 'u8[512]{0}', space=smem, size = 0x200, scoped, tag = 'prefetched SMEM operand 0']
  %s0 = inlined_call_operand.vmem [shape: s32[4], index: 0, kind: input, shape index: {}]
  %s1 = inlined_call_operand.hbm [shape: bf16[2,64,512], index: 1, kind: input, shape index: {}]
  %s2 = inlined_call_operand.vmem [shape: bf16[3,64,32], index: 2, kind: input, shape index: {}]
  %s3 = inlined_call_operand.vmem [shape: f32[3,1,32], index: 3, kind: input, shape index: {}]
  %s4 = inlined_call_operand.vmem [shape: f32[2,512,32], index: 4, kind: output, shape index: {}]
  %s5 = sld [smem:[#allocation0]]
  $region49: #{tpu_custom_call.1} parent=0
    _
  %s7 = ssub.s32 1, %s5
  %s8 = scalar_select 0, %s7, %s5
  %s9 = sshll.u32 %s0, 4
  %s10 = int_to_ptr.vmem [resolvable:$true] %s9
  %12 = dma.vmem_to_smem %s10, 16, [#allocation3], [#allocation2]
  %13 = dma.done [#allocation2], 16
  %14 = sfence
  $region1: #{tpu_custom_call.1} parent=0
    #allocation4 [shape = 'u8[32768]{0}', space=vmem, size = 0x8000, scoped, tag = 'input window, operand 1']
    #allocation5 [shape = 's32[2]{0}', space=sflag, size = 0x8, scoped, tag = 'scoped memory for tpu_custom_call.1']
    %15 = vsyncpa [#allocation5], 0
    %s16 = scalar_lea.sflag [#allocation5], 1
    %17 = vsyncpa %s16, 0
    loop: start=0, step=1, limit=10
    $region2: #{tpu_custom_call.1} parent=1 // loop_pre_header
      _
    $region3: #{tpu_custom_call.1} parent=1 // loop_header
      %s19 = sphi 0, %s23
      %p20 = scmp.ge.s32.totalorder %s19, 10
      %s26 = sphi 0, %s38
      %s27 = sphi 0, %s34
      %s28 = sphi 0, %s26
      %s29 = sphi 0, %s27
      %s30 = sphi 0, %s28
      %s31 = sphi 0, %s29
      %s43 = sphi 0, %s45
      %s46 = sphi 0, %s43
      %s47 = sphi 0, %s46
      %s63 = sphi 0, %s47
      %s67 = sphi 0, %s67
      %s69 = sphi 0, %s67
      %s70 = sphi 0, %s69
      %s84 = sphi 0, %s70
      %s88 = sphi 0, %s88
      %s90 = sphi 0, %s88
      %s91 = sphi 0, %s90
      %s105 = sphi 0, %s91
      %s113 = sphi 0, %s115
      %s116 = sphi 0, %s113
      %s117 = sphi 0, %s116
      %s133 = sphi 0, %s117
    $region4: #{tpu_custom_call.1} parent=1 // loop_header_branch
      %22 = sbr.rel (%p20) target = $region8
    $region5: #{tpu_custom_call.1} parent=1 // loop_body
      %s24 = ssub.s32 %s19, 1
      %s25 = ssub.s32 %s19, 2
      %s32 = sadd.s32 1, %s27
      %p33 = scmp.ge.s32.totalorder %s32, 4
      %s34 = scalar_select %p33, 0, %s32
      %s35 = sadd.s32 1, %s26
      %s36 = scalar_select %p33, %s35, %s26
      %p37 = scmp.ge.s32.totalorder %s36, 2
      %s38 = scalar_select %p37, 0, %s36
      %s39 = ssub.s32 %s26, %s38
      %s40 = ssub.s32 %s27, %s34
      %s41 = sor.u32 %s39, %s40
      %p42 = scmp.eq.s32.totalorder %s41, 0
      %s44 = sadd.s32 %s43, 1
      %s45 = scalar_select %p42, %s43, %s44
      %p48 = pneg %p42
      %p49 = scmp.eq.s32.totalorder %s19, 7
      %p50 = por %p48, %p49
      %p51 = scmp.ne.s32.totalorder %s43, %s46
      %p52 = scmp.eq.s32.totalorder %s19, 0
      %p53 = por %p51, %p52
      %p54 = scmp.ne.s32.totalorder %s43, %s46
      %p55 = scmp.eq.s32.totalorder %s24, 7
      %p56 = por %p54, %p55
      %p57 = scmp.ne.s32.totalorder %s46, %s47
      %p58 = scmp.eq.s32.totalorder %s24, 0
      %p59 = por %p57, %p58
      %p60 = scmp.ne.s32.totalorder %s46, %s47
      %p61 = scmp.eq.s32.totalorder %s25, 7
      %p62 = por %p60, %p61
      %p64 = scmp.ne.s32.totalorder %s47, %s63
      %p65 = scmp.eq.s32.totalorder %s25, 0
      %p66 = por %p64, %p65
      %s68 = sadd.s32 %s67, 1
      %p71 = scmp.eq.s32.totalorder %s19, 7
      %p72 = scmp.ne.s32.totalorder %s67, %s69
      %p73 = scmp.eq.s32.totalorder %s19, 0
      %p74 = por %p72, %p73
      %p75 = scmp.ne.s32.totalorder %s67, %s69
      %p76 = scmp.eq.s32.totalorder %s24, 7
      %p77 = por %p75, %p76
      %p78 = scmp.ne.s32.totalorder %s69, %s70
      %p79 = scmp.eq.s32.totalorder %s24, 0
      %p80 = por %p78, %p79
      %p81 = scmp.ne.s32.totalorder %s69, %s70
      %p82 = scmp.eq.s32.totalorder %s25, 7
      %p83 = por %p81, %p82
      %p85 = scmp.ne.s32.totalorder %s70, %s84
      %p86 = scmp.eq.s32.totalorder %s25, 0
      %p87 = por %p85, %p86
      %s89 = sadd.s32 %s88, 1
      %p92 = scmp.eq.s32.totalorder %s19, 7
      %p93 = scmp.ne.s32.totalorder %s88, %s90
      %p94 = scmp.eq.s32.totalorder %s19, 0
      %p95 = por %p93, %p94
      %p96 = scmp.ne.s32.totalorder %s88, %s90
      %p97 = scmp.eq.s32.totalorder %s24, 7
      %p98 = por %p96, %p97
      %p99 = scmp.ne.s32.totalorder %s90, %s91
      %p100 = scmp.eq.s32.totalorder %s24, 0
      %p101 = por %p99, %p100
      %p102 = scmp.ne.s32.totalorder %s90, %s91
      %p103 = scmp.eq.s32.totalorder %s25, 7
      %p104 = por %p102, %p103
      %p106 = scmp.ne.s32.totalorder %s91, %s105
      %p107 = scmp.eq.s32.totalorder %s25, 0
      %p108 = por %p106, %p107
      %s109 = ssub.s32 %s26, %s38
      %s110 = ssub.s32 %s27, %s34
      %s111 = sor.u32 %s109, %s110
      %p112 = scmp.eq.s32.totalorder %s111, 0
      %s114 = sadd.s32 %s113, 1
      %s115 = scalar_select %p112, %s113, %s114
      %p118 = pneg %p112
      %p119 = scmp.eq.s32.totalorder %s19, 7
      %p120 = por %p118, %p119
      %p121 = scmp.ne.s32.totalorder %s113, %s116
      %p122 = scmp.eq.s32.totalorder %s19, 0
      %p123 = por %p121, %p122
      %p124 = scmp.ne.s32.totalorder %s113, %s116
      %p125 = scmp.eq.s32.totalorder %s24, 7
      %p126 = por %p124, %p125
      %p127 = scmp.ne.s32.totalorder %s116, %s117
      %p128 = scmp.eq.s32.totalorder %s24, 0
      %p129 = por %p127, %p128
      %p130 = scmp.ne.s32.totalorder %s116, %s117
      %p131 = scmp.eq.s32.totalorder %s25, 7
      %p132 = por %p130, %p131
      %p134 = scmp.ne.s32.totalorder %s117, %s133
      %p135 = scmp.eq.s32.totalorder %s25, 0
      %p136 = por %p134, %p135
      %p137 = scmp.le.s32.totalorder 1, %s19
      %p138 = scmp.lt.s32.totalorder %s19, 9
      %p139 = pnand %p137, %p138
      %p140 = pneg %p139
      // Predicated region
      $region9: #{tpu_custom_call.1} parent=5 // pred_check
        _
      $region10: #{tpu_custom_call.1} parent=5 // pred_check_branch
        %142 = sbr.rel (%p139) target = $region12
      $region11: #{tpu_custom_call.1} parent=5 // pred_region
        %s143 = ssub.s32 %s19, 1
        // Predicated region
        $region13: #{tpu_custom_call.1} parent=11 // pred_check
          %p144 = pneg %p80
        $region14: #{tpu_custom_call.1} parent=11 // pred_check_branch
          %146 = sbr.rel (%p144) target = $region16
        $region15: #{tpu_custom_call.1} parent=11 // pred_region
          _
        $region16: #{tpu_custom_call.1} parent=11 // pred_fallthru
          _
        // Predicated region
        $region17: #{tpu_custom_call.1} parent=11 // pred_check
          %p147 = pneg %p101
        $region18: #{tpu_custom_call.1} parent=11 // pred_check_branch
          %149 = sbr.rel (%p147) target = $region20
        $region19: #{tpu_custom_call.1} parent=11 // pred_region
          _
        $region20: #{tpu_custom_call.1} parent=11 // pred_fallthru
          _
      $region12: #{tpu_custom_call.1} parent=5 // pred_fallthru
        _
      %p150 = scmp.lt.s32.totalorder %s19, 8
      // Predicated region
      $region21: #{tpu_custom_call.1} parent=5 // pred_check
        %p151 = pneg %p150
      $region22: #{tpu_custom_call.1} parent=5 // pred_check_branch
        %153 = sbr.rel (%p151) target = $region24
      $region23: #{tpu_custom_call.1} parent=5 // pred_region
        // Predicated region
        $region25: #{tpu_custom_call.1} parent=23 // pred_check
          %p154 = pneg %p53
        $region26: #{tpu_custom_call.1} parent=23 // pred_check_branch
          %156 = sbr.rel (%p154) target = $region28
        $region27: #{tpu_custom_call.1} parent=23 // pred_region
          %s157 = sand.u32 %s43, 1
          %s158 = scalar_lea.sflag [#allocation5], %s157
          %s159 = sand.u32 %s43, 1
          %s160 = smul.addr %s159, 32
          %s161 = scalar_lea.vmem [#allocation4], %s160
          %s163 = ssub.s32 512, 512
          %164 = vsyncadd %s158, %s163
          %s165 = smul.addr %s26, 32
          %s166 = sadd.s32 %s27, %s165
          %s167 = smul.addr %s166, 64
          %s168 = scalar_lea.hbm %s1, %s167
          %s169 = sshll.u32 %s161, 4
          %s170 = int_to_ptr.vmem [resolvable:$true] %s169
          %175 = dma.hbm_to_vmem [thread:$0]  %s168, 512, %s170, %s158, 256, 64, 4
        $region28: #{tpu_custom_call.1} parent=23 // pred_fallthru
          _
      $region24: #{tpu_custom_call.1} parent=5 // pred_fallthru
        _
      %p176 = scmp.le.s32.totalorder 1, %s19
      %p177 = scmp.lt.s32.totalorder %s19, 9
      %p178 = pnand %p176, %p177
      %p179 = pneg %p178
      // Predicated region
      $region29: #{tpu_custom_call.1} parent=5 // pred_check
        _
      $region30: #{tpu_custom_call.1} parent=5 // pred_check_branch
        %181 = sbr.rel (%p178) target = $region32
      $region31: #{tpu_custom_call.1} parent=5 // pred_region
        %s182 = ssub.s32 %s19, 1
        %s183 = sand.u32 %s46, 1
        %s184 = scalar_lea.sflag [#allocation5], %s183
        %s185 = sand.u32 %s46, 1
        %s186 = smul.addr %s185, 32
        %s187 = scalar_lea.vmem [#allocation4], %s186
        // Predicated region
        $region33: #{tpu_custom_call.1} parent=31 // pred_check
          %p188 = pneg %p59
        $region34: #{tpu_custom_call.1} parent=31 // pred_check_branch
          %190 = sbr.rel (%p188) target = $region36
        $region35: #{tpu_custom_call.1} parent=31 // pred_region
          %191 = dma.done %s184, 512
        $region36: #{tpu_custom_call.1} parent=31 // pred_fallthru
          _
        %s192 = sand.u32 %s46, 1
        %s193 = scalar_lea.sflag [#allocation5], %s192
        %s194 = sand.u32 %s46, 1
        %s195 = smul.addr %s194, 32
        %s196 = scalar_lea.vmem [#allocation4], %s195
        %p197 = pneg %p59
        %p198 = pneg %p56
        %p199 = pneg %p80
        %p200 = pneg %p77
        %p201 = pneg %p101
        %p202 = pneg %p98
        %p203 = pneg %p129
        %p204 = pneg %p126
        %s205 = smul.u32 16, %s29
        %p206 = scmp.lt.s32.totalorder %s28, 1
        %s207 = scalar_select %p206, %s28, 1
        %p208 = scmp.lt.s32.totalorder %s205, 63
        %s209 = scalar_select %p208, %s205, 63
        %s210 = smul.addr %s207, 64
        %s211 = sadd.s32 %s209, %s210
        %s212 = smul.addr %s211, 8
        %s213 = scalar_lea.vmem %s4, %s212
        %s214 = smul.u32 16, %s29
        %p215 = scmp.lt.s32.totalorder %s28, 1
        %s216 = scalar_select %p215, %s28, 1
        %p217 = scmp.lt.s32.totalorder %s214, 63
        %s218 = scalar_select %p217, %s214, 63
        %s219 = smul.addr %s216, 64
        %s220 = sadd.s32 %s218, %s219
        %s221 = smul.addr %s220, 8
        %s222 = scalar_lea.vmem %s4, %s221
        %s223 = smul.u32 16, %s29
        %s225 = sld [smem:[#allocation3 + %s29]]
        %v226 = vld [vmem:[%s187] sm:$0xf]
        %v227 = vld [vmem:[%s187 + $0x4] sm:$0xf]
        %v228 = vld [vmem:[%s187 + $0x8] sm:$0xf]
        %v229 = vld [vmem:[%s187 + $0xc] sm:$0xf]
        %v230 = vld [vmem:[%s187 + $0x10] sm:$0xf]
        %v231 = vld [vmem:[%s187 + $0x14] sm:$0xf]
        %v232 = vld [vmem:[%s187 + $0x18] sm:$0xf]
        %v233 = vld [vmem:[%s187 + $0x1c] sm:$0xf]
        %s234 = smul.u32 %s225, 8
        %s235 = smul.addr %s234, 4
        %s236 = scalar_lea.vmem %s2, %s235
        %v237 = vld [vmem:[%s236] sm:$0xf]
        %v238 = vld [vmem:[%s236 + $0x4] sm:$0xf]
        %v239 = vld [vmem:[%s236 + $0x8] sm:$0xf]
        %v240 = vld [vmem:[%s236 + $0xc] sm:$0xf]
        %v241 = vld [vmem:[%s236 + $0x10] sm:$0xf]
        %v242 = vld [vmem:[%s236 + $0x14] sm:$0xf]
        %v243 = vld [vmem:[%s236 + $0x18] sm:$0xf]
        %v244 = vld [vmem:[%s236 + $0x1c] sm:$0xf]
        %s245 = scalar_lea.vmem %s3, %s225
        %v246 = vld [vmem:[%s245] sm:$0x1]
        %v248 = vlaneseq
        %v249 = vshrl.u32 %v248, 7
        %v250 = vsub.s32 0, %v249
        %v251 = vrot.slane %v246, %v250
        %v261 = vunpack.c.l.b16 %v226
        %v262 = vunpack.c.l.b16 %v227
        %v263 = vunpack.c.l.b16 %v228
        %v264 = vunpack.c.l.b16 %v229
        %v265 = vunpack.c.l.b16 %v230
        %v266 = vunpack.c.l.b16 %v231
        %v267 = vunpack.c.l.b16 %v232
        %v268 = vunpack.c.l.b16 %v233
        %v269 = vpack.c.b16 %v262, %v261
        %v270 = vpack.c.b16 %v264, %v263
        %v271 = vpack.c.b16 %v266, %v265
        %v272 = vpack.c.b16 %v268, %v267
        %277 = vxpose.xlu0.c.b16.start [1/8] %v269, 128
        %278 = vxpose.xlu0.c.b16.cont [2/8] %v270, 128
        %279 = vxpose.xlu0.c.b16.cont [3/8] %v271, 128
        %280 = vxpose.xlu0.c.b16.cont [4/8] %v272, 128
        %281 = vxpose.xlu0.c.b16.cont [5/8] 0, 128
        %282 = vxpose.xlu0.c.b16.cont [6/8] 0, 128
        %283 = vxpose.xlu0.c.b16.cont [7/8] 0, 128
        %284 = vxpose.xlu0.c.b16.end [8/8] 0, 128
        %v285 = vpop.trf.xlu0
        %v286 = vpop.trf.xlu0
        %v287 = vpop.trf.xlu0
        %v288 = vpop.trf.xlu0
        %v289 = vpop.trf.xlu0
        %v290 = vpop.trf.xlu0
        %v291 = vpop.trf.xlu0
        %v292 = vpop.trf.xlu0
        %v301 = vunpack.c.l.b16 %v237
        %v302 = vunpack.c.l.b16 %v238
        %v303 = vunpack.c.l.b16 %v239
        %v304 = vunpack.c.l.b16 %v240
        %v305 = vunpack.c.l.b16 %v241
        %v306 = vunpack.c.l.b16 %v242
        %v307 = vunpack.c.l.b16 %v243
        %v308 = vunpack.c.l.b16 %v244
        %v309 = vpack.c.b16 %v302, %v301
        %v310 = vpack.c.b16 %v304, %v303
        %v311 = vpack.c.b16 %v306, %v305
        %v312 = vpack.c.b16 %v308, %v307
        %vm317 = vcmask 523264
        %v319 = vsel %vm317, %v285, 0
        %v322 = vsel %vm317, %v286, 0
        %v325 = vsel %vm317, %v287, 0
        %v328 = vsel %vm317, %v288, 0
        %v331 = vsel %vm317, %v289, 0
        %v334 = vsel %vm317, %v290, 0
        %v337 = vsel %vm317, %v291, 0
        %v340 = vsel %vm317, %v292, 0
        %342 = vmatprep.subr.bf16.mxu0 0
        %343 = vmatpush1.bf16.msra.mxu0 %v309
        %344 = vmatprep.subr.bf16.mxu0 0
        %345 = vmatpush1.bf16.msra.mxu0 %v310
        %346 = vmatprep.subr.bf16.mxu0 0
        %347 = vmatpush1.bf16.msra.mxu0 %v311
        %348 = vmatprep.subr.bf16.mxu0 0
        %349 = vmatpush1.bf16.msra.mxu0 %v312
        %350 = vmatprep.subr.bf16.mxu0 0
        %351 = vmatpush1.bf16.msra.mxu0 0
        %352 = vmatprep.subr.bf16.mxu0 0
        %353 = vmatpush1.bf16.msra.mxu0 0
        %354 = vmatprep.subr.bf16.mxu0 0
        %355 = vmatpush1.bf16.msra.mxu0 0
        %356 = vmatprep.subr.bf16.mxu0 0
        %357 = vmatpush1.bf16.msra.mxu0 0
        %358 = vmatprep.subr.bf16.mxu0 0
        %359 = vmatpush1.bf16.msra.mxu0 0
        %360 = vmatprep.subr.bf16.mxu0 0
        %361 = vmatpush1.bf16.msra.mxu0 0
        %362 = vmatprep.subr.bf16.mxu0 0
        %363 = vmatpush1.bf16.msra.mxu0 0
        %364 = vmatprep.subr.bf16.mxu0 0
        %365 = vmatpush1.bf16.msra.mxu0 0
        %366 = vmatprep.subr.bf16.mxu0 0
        %367 = vmatpush1.bf16.msra.mxu0 0
        %368 = vmatprep.subr.bf16.mxu0 0
        %369 = vmatpush1.bf16.msra.mxu0 0
        %370 = vmatprep.subr.bf16.mxu0 0
        %371 = vmatpush1.bf16.msra.mxu0 0
        %372 = vmatprep.subr.bf16.mxu0 0
        %373 = vmatpush1.bf16.msra.mxu0 0
        %374 = vmatprep.mubr.bf16.mxu0 0
        %375 = vmatmul.mubr.bf16.gmra.mrb[0].mxu0 %v319
        %v376 = vpop.f32.mrb[0].mxu0
        %v377 = vadd.f32 %v251, %v376
        %v378 = vpop.f32.mrb[0].mxu0
        %v379 = vpop.f32.mrb[0].mxu0
        %v380 = vadd.f32 %v251, %v379
        %v381 = vpop.f32.mrb[0].mxu0
        %382 = vmatprep.mubr.bf16.mxu0 0
        %383 = vmatmul.mubr.bf16.gmra.mrb[0].mxu0 %v322
        %v384 = vpop.f32.mrb[0].mxu0
        %v385 = vadd.f32 %v251, %v384
        %v386 = vpop.f32.mrb[0].mxu0
        %v387 = vpop.f32.mrb[0].mxu0
        %v388 = vadd.f32 %v251, %v387
        %v389 = vpop.f32.mrb[0].mxu0
        %390 = vmatprep.mubr.bf16.mxu0 0
        %391 = vmatmul.mubr.bf16.gmra.mrb[0].mxu0 %v325
        %v392 = vpop.f32.mrb[0].mxu0
        %v393 = vadd.f32 %v251, %v392
        %v394 = vpop.f32.mrb[0].mxu0
        %v395 = vpop.f32.mrb[0].mxu0
        %v396 = vadd.f32 %v251, %v395
        %v397 = vpop.f32.mrb[0].mxu0
        %398 = vmatprep.mubr.bf16.mxu0 0
        %399 = vmatmul.mubr.bf16.gmra.mrb[0].mxu0 %v328
        %v400 = vpop.f32.mrb[0].mxu0
        %v401 = vadd.f32 %v251, %v400
        %v402 = vpop.f32.mrb[0].mxu0
        %v403 = vpop.f32.mrb[0].mxu0
        %v404 = vadd.f32 %v251, %v403
        %v405 = vpop.f32.mrb[0].mxu0
        %406 = vmatprep.mubr.bf16.mxu0 0
        %407 = vmatmul.mubr.bf16.gmra.mrb[0].mxu0 %v331
        %v408 = vpop.f32.mrb[0].mxu0
        %v409 = vadd.f32 %v251, %v408
        %v410 = vpop.f32.mrb[0].mxu0
        %v411 = vpop.f32.mrb[0].mxu0
        %v412 = vadd.f32 %v251, %v411
        %v413 = vpop.f32.mrb[0].mxu0
        %414 = vmatprep.mubr.bf16.mxu0 0
        %415 = vmatmul.mubr.bf16.gmra.mrb[0].mxu0 %v334
        %v416 = vpop.f32.mrb[0].mxu0
        %v417 = vadd.f32 %v251, %v416
        %v418 = vpop.f32.mrb[0].mxu0
        %v419 = vpop.f32.mrb[0].mxu0
        %v420 = vadd.f32 %v251, %v419
        %v421 = vpop.f32.mrb[0].mxu0
        %422 = vmatprep.mubr.bf16.mxu0 0
        %423 = vmatmul.mubr.bf16.gmra.mrb[0].mxu0 %v337
        %v424 = vpop.f32.mrb[0].mxu0
        %v425 = vadd.f32 %v251, %v424
        %v426 = vpop.f32.mrb[0].mxu0
        %v427 = vpop.f32.mrb[0].mxu0
        %v428 = vadd.f32 %v251, %v427
        %v429 = vpop.f32.mrb[0].mxu0
        %430 = vmatprep.mubr.bf16.mxu0 0
        %431 = vmatmul.mubr.bf16.gmra.mrb[0].mxu0 %v340
        %v432 = vpop.f32.mrb[0].mxu0
        %v433 = vadd.f32 %v251, %v432
        %v434 = vpop.f32.mrb[0].mxu0
        %v435 = vpop.f32.mrb[0].mxu0
        %v436 = vadd.f32 %v251, %v435
        %v437 = vpop.f32.mrb[0].mxu0
        %438 = vdwg.mxu0
        %vm439 = vcmask 261120
        %440 = vst.msk [vmem:[%s222] sm:$0xff] %vm439, %v377
        %441 = vst.msk [vmem:[%s222 + $0x8] sm:$0xff] %vm439, %v380
        %442 = vst.msk [vmem:[%s222 + $0x10] sm:$0xff] %vm439, %v385
        %443 = vst.msk [vmem:[%s222 + $0x18] sm:$0xff] %vm439, %v388
        %444 = vst.msk [vmem:[%s222 + $0x20] sm:$0xff] %vm439, %v393
        %445 = vst.msk [vmem:[%s222 + $0x28] sm:$0xff] %vm439, %v396
        %446 = vst.msk [vmem:[%s222 + $0x30] sm:$0xff] %vm439, %v401
        %447 = vst.msk [vmem:[%s222 + $0x38] sm:$0xff] %vm439, %v404
        %448 = vst.msk [vmem:[%s222 + $0x40] sm:$0xff] %vm439, %v409
        %449 = vst.msk [vmem:[%s222 + $0x48] sm:$0xff] %vm439, %v412
        %450 = vst.msk [vmem:[%s222 + $0x50] sm:$0xff] %vm439, %v417
        %451 = vst.msk [vmem:[%s222 + $0x58] sm:$0xff] %vm439, %v420
        %452 = vst.msk [vmem:[%s222 + $0x60] sm:$0xff] %vm439, %v425
        %453 = vst.msk [vmem:[%s222 + $0x68] sm:$0xff] %vm439, %v428
        %454 = vst.msk [vmem:[%s222 + $0x70] sm:$0xff] %vm439, %v433
        %455 = vst.msk [vmem:[%s222 + $0x78] sm:$0xff] %vm439, %v436
        %s456 = smul.u32 16, %s29
        %p457 = scmp.lt.s32.totalorder %s28, 1
        %s458 = scalar_select %p457, %s28, 1
        %p459 = scmp.lt.s32.totalorder %s456, 63
        %s460 = scalar_select %p459, %s456, 63
        %s461 = smul.addr %s458, 64
        %s462 = sadd.s32 %s460, %s461
        %s463 = smul.addr %s462, 8
        %s464 = scalar_lea.vmem %s4, %s463
        // Predicated region
        $region37: #{tpu_custom_call.1} parent=31 // pred_check
          %p465 = pneg %p126
        $region38: #{tpu_custom_call.1} parent=31 // pred_check_branch
          %467 = sbr.rel (%p465) target = $region40
        $region39: #{tpu_custom_call.1} parent=31 // pred_region
          %s468 = smul.u32 16, %s29
        $region40: #{tpu_custom_call.1} parent=31 // pred_fallthru
          _
      $region32: #{tpu_custom_call.1} parent=5 // pred_fallthru
        _
      %p469 = scmp.le.s32.totalorder 2, %s19
      // Predicated region
      $region41: #{tpu_custom_call.1} parent=5 // pred_check
        %p470 = pneg %p469
      $region42: #{tpu_custom_call.1} parent=5 // pred_check_branch
        %472 = sbr.rel (%p470) target = $region44
      $region43: #{tpu_custom_call.1} parent=5 // pred_region
        %s473 = ssub.s32 %s19, 2
        // Predicated region
        $region45: #{tpu_custom_call.1} parent=43 // pred_check
          %p474 = pneg %p132
        $region46: #{tpu_custom_call.1} parent=43 // pred_check_branch
          %476 = sbr.rel (%p474) target = $region48
        $region47: #{tpu_custom_call.1} parent=43 // pred_region
          %s477 = smul.u32 16, %s31
          %p478 = scmp.lt.s32.totalorder %s30, 1
          %s479 = scalar_select %p478, %s30, 1
          %p480 = scmp.lt.s32.totalorder %s477, 63
          %s481 = scalar_select %p480, %s477, 63
          %s482 = smul.addr %s479, 64
          %s483 = sadd.s32 %s481, %s482
          %s484 = smul.addr %s483, 8
          %s485 = scalar_lea.vmem %s4, %s484
        $region48: #{tpu_custom_call.1} parent=43 // pred_fallthru
          _
      $region44: #{tpu_custom_call.1} parent=5 // pred_fallthru
        _
    $region6: #{tpu_custom_call.1} parent=1 // loop_footer
      %s23 = sadd.s32 1, %s19
    $region7: #{tpu_custom_call.1} parent=1 // loop_footer_branch
      %18 = sbr.rel target = $region3
    $region8: #{tpu_custom_call.1} parent=1 // loop_exit
      _
    %486 = vsyncpa [#allocation5], 1
    %s487 = scalar_lea.sflag [#allocation5], 1
    %488 = vsyncpa %s487, 1

</llo_original>
